<compile_context>
chip_gen: v5e
topology: v5e:2x2
jax: 0.10.0
libtpu: 0.0.40
codegen_flags: <defaults>
</compile_context>

<pallas_src>
import math

import jax
import jax.numpy as jnp
import numpy as np
from jax.experimental import pallas as pl
from jax.experimental.pallas import tpu as pltpu


def _chunk_sizes(total, num_chunks):
    q, r = divmod(total, num_chunks)
    return [q + 1] * r + [q] * (num_chunks - r)


def _round_up(v, m):
    return (v + m - 1) // m * m


def _vmem_capacity_bytes():
    """Physical VMEM of the current chip; conservative fallback (v7x = 64 MiB)."""
    try:
        info = pltpu.get_tpu_info()
        for attr in ("vmem_capacity_bytes", "vmem_size_bytes", "vmem_bytes"):
            v = getattr(info, attr, None)
            if v:
                return int(v)
    except Exception:
        pass
    return 64 * 1024 * 1024


# ---------------------------------------------------------------------------
# Routed per-chunk linear.  Only *selected* chunks are DMA'd / matmul'd thanks
# to the scalar-prefetch-driven index maps; the body is a single bf16 MXU
# matmul (f32 accumulate) + bias add, stored straight into the output slab.
# ---------------------------------------------------------------------------
def routed_kernel(idx_ref, x_ref, w_ref, b_ref, out_ref):
    # idx_ref: SMEM [top_k] int32 (scalar prefetch; consumed by the index maps)
    # x_ref  : VMEM [TB, cin_pad]  bf16   selected input chunk, one batch tile
    # w_ref  : VMEM [cin_pad, TN]  bf16   selected chunk weights, one N tile
    # b_ref  : VMEM [1, TN]        f32    selected chunk bias,    one N tile
    # out_ref: VMEM [TB, TN]       x.dtype
    del idx_ref
    y = jnp.dot(x_ref[...], w_ref[...], preferred_element_type=jnp.float32)
    out_ref[...] = (y + b_ref[...]).astype(out_ref.dtype)


class BlockChunkedRoutingPallas:
    """JAX/Pallas port of BlockChunkedRouting."""

    def __init__(self, in_features, out_features, num_chunks=4, top_k=2, key=None,
                 compute_dtype=jnp.bfloat16):
        self.in_features = in_features
        self.out_features = out_features
        self.num_chunks = num_chunks
        self.top_k = top_k
        self.compute_dtype = compute_dtype
        self.in_chunk_sizes = _chunk_sizes(in_features, num_chunks)
        self.out_chunk_sizes = _chunk_sizes(out_features, num_chunks)

        # Lane-dense padded chunk widths.  128-aligned; bumped to 256 (v6e/v7x
        # MXU width) only when the real chunk width already exceeds 128, so
        # tiny chunks don't pay 2x zero-padding for no MXU benefit.
        max_cin = max(self.in_chunk_sizes)
        max_cout = max(self.out_chunk_sizes)
        self.cin_pad = _round_up(max_cin, 256 if max_cin > 128 else 128)
        self.cout_pad = _round_up(max_cout, 256 if max_cout > 128 else 128)

        # Generation-aware VMEM sizing: ~40% of physical as the double-buffered
        # working-set budget, explicit scoped-VMEM override with headroom.
        self.vmem_phys = _vmem_capacity_bytes()
        self.vmem_budget = (self.vmem_phys * 2) // 5
        self.vmem_limit = min((self.vmem_phys * 3) // 4, 100 * 1024 * 1024)

        if key is None:
            key = jax.random.PRNGKey(0)
        keys = jax.random.split(key, 2 * num_chunks)
        self.weights = []   # f32 masters (used by the pure-JAX reference)
        self.biases = []
        for i in range(num_chunks):
            cin, cout = self.in_chunk_sizes[i], self.out_chunk_sizes[i]
            bound = 1.0 / math.sqrt(cin)  # nn.Linear-style uniform init
            w = jax.random.uniform(keys[2 * i], (cin, cout), jnp.float32, -bound, bound)
            b = jax.random.uniform(keys[2 * i + 1], (1, cout), jnp.float32, -bound, bound)
            self.weights.append(w)
            self.biases.append(b)

        # Stacked, zero-padded expert weights.  Zero padding keeps the matmul
        # exact (padded x columns are also zero).  Weights in bf16 (MXU native),
        # bias kept in f32 (tiny, adds precision for free).
        w_stacked = np.zeros((num_chunks, self.cin_pad, self.cout_pad), np.float32)
        b_stacked = np.zeros((num_chunks, 1, self.cout_pad), np.float32)
        for i in range(num_chunks):
            cin, cout = self.in_chunk_sizes[i], self.out_chunk_sizes[i]
            w_stacked[i, :cin, :cout] = np.asarray(self.weights[i])
            b_stacked[i, 0, :cout] = np.asarray(self.biases[i][0])
        self.w_stacked = jnp.asarray(w_stacked, dtype=compute_dtype)
        self.b_stacked = jnp.asarray(b_stacked, dtype=jnp.float32)

    # Tile picking: keep TB as large as the chip allows (cap 1024 on 128 MiB
    # v5e/v6e, 512 on 64 MiB v7x); if the resident weight block blows the
    # budget, tile the N (out) axis first instead of starving the MXU M dim.
    def _pick_tiles(self, batch, out_itemsize):
        cin_pad, cout_pad = self.cin_pad, self.cout_pad
        in_b = np.dtype(self.compute_dtype).itemsize

        def working_set(tb, tn):
            # BlockSpec auto-pipelining double-buffers every operand.
            x_bytes = tb * cin_pad * in_b
            w_bytes = cin_pad * tn * in_b
            b_bytes = tn * 4
            o_bytes = tb * tn * out_itemsize
            return 2 * (x_bytes + w_bytes + b_bytes + o_bytes)

        tb_cap = 512 if self.vmem_phys <= (64 << 20) else 1024
        tb = min(tb_cap, _round_up(max(batch, 1), 16))  # bf16 sublane packing

        # N-tile candidates: divisors of cout_pad that are multiples of 128.
        n_cands = sorted(
            (d for d in range(128, cout_pad + 1, 128) if cout_pad % d == 0),
            reverse=True)
        tn = n_cands[-1]
        for cand in n_cands:
            if working_set(tb, cand) <= self.vmem_budget:
                tn = cand
                break
        while tb > 16 and working_set(tb, tn) > self.vmem_budget:
            tb = max(16, ((tb // 2) // 16) * 16)  # last resort: shrink TB
        return tb, tn

    def __call__(self, x):
        B = x.shape[0]
        C = self.num_chunks
        cin_pad, cout_pad = self.cin_pad, self.cout_pad
        out_dtype = x.dtype
        out_itemsize = np.dtype(out_dtype).itemsize

        TB, TN = self._pick_tiles(B, out_itemsize)
        B_pad = _round_up(max(B, 1), TB)
        n_bt = B_pad // TB
        n_nt = cout_pad // TN

        # ---------- Activities: plain XLA directly on the original x (f32).
        # One tiny fused reduction per chunk; no extra Pallas pass over the
        # zero-padded slab.
        off = 0
        acts = []
        for c in range(C):
            cin = self.in_chunk_sizes[c]
            acts.append(jnp.mean(jnp.abs(x[:, off:off + cin].astype(jnp.float32))))
            off += cin
        activities = jnp.stack(acts)

        # ---------- Routing decision (C scalars, plain JAX glue).
        _, topk_idx = jax.lax.top_k(activities, self.top_k)
        topk_idx = topk_idx.astype(jnp.int32)
        gates = jnp.zeros((C,), jnp.bool_).at[topk_idx].set(True)

        # ---------- Layout plumbing: split x into chunks and zero-pad each to
        # a lane-dense [C, B_pad, cin_pad] bf16 slab (zero padding keeps the
        # matmul exact since padded weight rows are also zero).
        off = 0
        chunks = []
        for c in range(C):
            cin = self.in_chunk_sizes[c]
            xc = x[:, off:off + cin].astype(self.compute_dtype)
            chunks.append(jnp.pad(xc, ((0, B_pad - B), (0, cin_pad - cin))))
            off += cin
        x_chunked = jnp.stack(chunks, axis=0)  # [C, B_pad, cin_pad] bf16

        # ---------- Routed per-chunk linear (MoE scalar-prefetch pattern).
        in_b = np.dtype(self.compute_dtype).itemsize
        flops = 2 * self.top_k * B_pad * cin_pad * cout_pad
        bytes_acc = (in_b * self.top_k * (n_nt * B_pad * cin_pad + cin_pad * cout_pad)
                     + 4 * self.top_k * cout_pad
                     + out_itemsize * self.top_k * B_pad * cout_pad)

        out_chunked = pl.pallas_call(
            routed_kernel,
            out_shape=jax.ShapeDtypeStruct((C, B_pad, cout_pad), out_dtype),
            grid_spec=pltpu.PrefetchScalarGridSpec(
                num_scalar_prefetch=1,
                # chunk outermost (weight residency), N tile middle, batch inner
                # -> W block constant across the innermost batch axis.
                grid=(self.top_k, n_nt, n_bt),
                in_specs=[
                    # x: selected input chunk, tiled over batch.
                    pl.BlockSpec((None, TB, cin_pad),
                                 lambda k, n, i, idx: (idx[k], i, 0)),
                    # W: selected expert weights, one N tile, resident over batch.
                    pl.BlockSpec((None, cin_pad, TN),
                                 lambda k, n, i, idx: (idx[k], 0, n)),
                    # b: selected expert bias, one N tile.
                    pl.BlockSpec((None, 1, TN),
                                 lambda k, n, i, idx: (idx[k], 0, n)),
                ],
                out_specs=pl.BlockSpec((None, TB, TN),
                                       lambda k, n, i, idx: (idx[k], i, n)),
            ),
            compiler_params=pltpu.CompilerParams(
                dimension_semantics=("parallel", "parallel", "parallel"),
                vmem_limit_bytes=self.vmem_limit),
            cost_estimate=pl.CostEstimate(flops=flops, transcendentals=0,
                                          bytes_accessed=bytes_acc),
        )(topk_idx, x_chunked, self.w_stacked, self.b_stacked)

        # Non-selected chunks were never visited by the grid (undefined HBM):
        # gate only the sliced real [B, cout_c] regions — no full-slab rewrite.
        zero = jnp.zeros((), out_dtype)
        outs = []
        for c in range(C):
            cout = self.out_chunk_sizes[c]
            outs.append(jnp.where(gates[c], out_chunked[c, :B, :cout], zero))
        out = jnp.concatenate(outs, axis=1)

        # TODO(synk): PyTorch returns `activities` as a Python list via .item()
        # host syncs; here it is returned as a device array with the same values.
        return out, activities


def reference_forward(mod, x):
    """Pure-JAX f32 reference with identical semantics."""
    off = 0
    chunks, acts = [], []
    for c in range(mod.num_chunks):
        cin = mod.in_chunk_sizes[c]
        xc = x[:, off:off + cin]
        off += cin
        chunks.append(xc)
        acts.append(jnp.mean(jnp.abs(xc)))
    acts = jnp.stack(acts)
    _, topk_idx = jax.lax.top_k(acts, mod.top_k)
    outs = []
    for c in range(mod.num_chunks):
        y = chunks[c] @ mod.weights[c] + mod.biases[c]
        sel = jnp.any(topk_idx == c)
        outs.append(jnp.where(sel, y, jnp.zeros_like(y)))
    return jnp.concatenate(outs, axis=1), acts


if __name__ == "__main__":
    in_features, out_features, num_chunks, top_k = 32, 32, 4, 2
    batch = 2

    mod = BlockChunkedRoutingPallas(in_features, out_features, num_chunks, top_k,
                                    key=jax.random.PRNGKey(42))
    x = jax.random.normal(jax.random.PRNGKey(0), (batch, in_features), jnp.float32)

    out, activities = mod(x)
    out = jax.block_until_ready(out)
    activities = jax.block_until_ready(activities)

    ref_out, ref_acts = reference_forward(mod, x)
    assert out.shape == (batch, out_features)
    assert activities.shape == (num_chunks,)
    # Activities are computed in f32 -> tight tolerance.
    assert np.allclose(np.asarray(activities), np.asarray(ref_acts), atol=1e-5, rtol=1e-5)
    # Matmul runs on the bf16 MXU path with f32 accumulation -> loosened tolerance.
    assert np.allclose(np.asarray(out), np.asarray(ref_out), atol=3e-2, rtol=3e-2)

    print("KERNEL_OK")
</pallas_src>

<mosaic_0001>
module attributes {stable_mosaic.version = 11 : i64} {
  func.func @routed_kernel(%arg0: i32, %arg1: i32, %arg2: i32, %arg3: memref<2xi32, #tpu.memory_space<smem>>, %arg4: memref<1x16x128xbf16, #tpu.memory_space<vmem>>, %arg5: memref<1x128x128xbf16, #tpu.memory_space<vmem>>, %arg6: memref<1x1x128xf32, #tpu.memory_space<vmem>>, %arg7: memref<1x16x128xf32, #tpu.memory_space<vmem>>) attributes {dimension_semantics = [#tpu.dimension_semantics<parallel>, #tpu.dimension_semantics<parallel>, #tpu.dimension_semantics<parallel>], iteration_bounds = array<i64: 2, 1, 1>, scalar_prefetch = 1 : i64, scratch_operands = 0 : i64, tpu.core_type = #tpu.core_type<tc>, window_params = [{transform_indices = @transform_0, window_bounds = array<i64: 1, 16, 128>}, {transform_indices = @transform_1, window_bounds = array<i64: 1, 128, 128>}, {transform_indices = @transform_2, window_bounds = array<i64: 1, 1, 128>}, {transform_indices = @transform_3, window_bounds = array<i64: 1, 16, 128>}]} {
    %c0 = arith.constant 0 : index
    %c0_0 = arith.constant 0 : index
    %c0_1 = arith.constant 0 : index
    %0 = vector.load %arg4[%c0, %c0_0, %c0_1] : memref<1x16x128xbf16, #tpu.memory_space<vmem>>, vector<1x16x128xbf16>
    %1 = vector.shape_cast %0 : vector<1x16x128xbf16> to vector<16x128xbf16>
    %c0_2 = arith.constant 0 : index
    %c0_3 = arith.constant 0 : index
    %c0_4 = arith.constant 0 : index
    %2 = vector.load %arg5[%c0_2, %c0_3, %c0_4] : memref<1x128x128xbf16, #tpu.memory_space<vmem>>, vector<1x128x128xbf16>
    %3 = vector.shape_cast %2 : vector<1x128x128xbf16> to vector<128x128xbf16>
    %cst = arith.constant dense<0.000000e+00> : vector<16x128xf32>
    %4 = tpu.matmul %1, %3, %cst {dimension_numbers = #tpu.dot_dimension_numbers<[1], [0], [0], [1], [0, 0, 1, 1], [], []>} : vector<16x128xbf16>, vector<128x128xbf16>, vector<16x128xf32> -> vector<16x128xf32>
    %c0_5 = arith.constant 0 : index
    %c0_6 = arith.constant 0 : index
    %c0_7 = arith.constant 0 : index
    %5 = vector.load %arg6[%c0_5, %c0_6, %c0_7] : memref<1x1x128xf32, #tpu.memory_space<vmem>>, vector<1x1x128xf32>
    %6 = vector.shape_cast %5 : vector<1x1x128xf32> to vector<1x128xf32>
    %7 = vector.broadcast %6 : vector<1x128xf32> to vector<16x128xf32>
    %8 = arith.addf %4, %7 : vector<16x128xf32>
    %c0_8 = arith.constant 0 : index
    %c0_9 = arith.constant 0 : index
    %c0_10 = arith.constant 0 : index
    %9 = vector.load %arg7[%c0_8, %c0_9, %c0_10] : memref<1x16x128xf32, #tpu.memory_space<vmem>>, vector<1x16x128xf32>
    %10 = vector.shape_cast %9 : vector<1x16x128xf32> to vector<16x128xf32>
    %11 = vector.shape_cast %8 : vector<16x128xf32> to vector<1x16x128xf32>
    tpu.vector_store %arg7[%c0_8, %c0_9, %c0_10], %11 {strides = array<i32>} : memref<1x16x128xf32, #tpu.memory_space<vmem>>, vector<1x16x128xf32>,
    return
  }
  func.func @transform_0(%arg0: i32, %arg1: i32, %arg2: i32, %arg3: memref<2xi32, #tpu.memory_space<smem>>) -> (i32, i32, i32) {
    %0 = arith.index_cast %arg0 : i32 to index
    %1 = memref.load %arg3[%0] : memref<2xi32, #tpu.memory_space<smem>>
    %c0_i32 = arith.constant 0 : i32
    %c0_i32_0 = arith.constant 0 : i32
    return %1, %arg2, %c0_i32 : i32, i32, i32
  }
  func.func @transform_1(%arg0: i32, %arg1: i32, %arg2: i32, %arg3: memref<2xi32, #tpu.memory_space<smem>>) -> (i32, i32, i32) {
    %0 = arith.index_cast %arg0 : i32 to index
    %1 = memref.load %arg3[%0] : memref<2xi32, #tpu.memory_space<smem>>
    %c0_i32 = arith.constant 0 : i32
    %c0_i32_0 = arith.constant 0 : i32
    return %1, %c0_i32, %arg1 : i32, i32, i32
  }
  func.func @transform_2(%arg0: i32, %arg1: i32, %arg2: i32, %arg3: memref<2xi32, #tpu.memory_space<smem>>) -> (i32, i32, i32) {
    %0 = arith.index_cast %arg0 : i32 to index
    %1 = memref.load %arg3[%0] : memref<2xi32, #tpu.memory_space<smem>>
    %c0_i32 = arith.constant 0 : i32
    %c0_i32_0 = arith.constant 0 : i32
    return %1, %c0_i32, %arg1 : i32, i32, i32
  }
  func.func @transform_3(%arg0: i32, %arg1: i32, %arg2: i32, %arg3: memref<2xi32, #tpu.memory_space<smem>>) -> (i32, i32, i32) {
    %0 = arith.index_cast %arg0 : i32 to index
    %1 = memref.load %arg3[%0] : memref<2xi32, #tpu.memory_space<smem>>
    %c0_i32 = arith.constant 0 : i32
    return %1, %arg2, %arg1 : i32, i32, i32
  }
}

</mosaic_0001>

<llo_original>
// kernel: tpu_custom_call.1
$region0: #{tpu_custom_call.1}
  #allocation0 [shape = 'u32[]', space=smem, size = 0x4, offset = 0x4, fixed_abs, tag = 'smem constant byte address 0x4 - core index']
  #allocation1 [shape = 'u32[72,128]{1,0:T(1,128)}', space=vmem, size = 0x9000, scoped, tag = 'internal scratch']
  #allocation2 [shape = 's32[1]{0}', space=sflag, size = 0x4, scoped, tag = 'scoped memory for tpu_custom_call.1']
  #allocation3 [shape = 'u8[512]{0}', space=smem, size = 0x200, scoped, tag = 'prefetched SMEM operand 0']
  %s0 = inlined_call_operand.hbm [shape: s32[2], index: 0, kind: input, shape index: {}]
  %s1 = inlined_call_operand.hbm [shape: bf16[4,16,128], index: 1, kind: input, shape index: {}]
  %s2 = inlined_call_operand.hbm [shape: bf16[4,128,128], index: 2, kind: input, shape index: {}]
  %s3 = inlined_call_operand.hbm [shape: f32[4,1,128], index: 3, kind: input, shape index: {}]
  %s4 = inlined_call_operand.hbm [shape: f32[4,16,128], index: 4, kind: output, shape index: {}]
  %s5 = sld [smem:[#allocation0]]
  $region57: #{tpu_custom_call.1} parent=0
    _
  %s7 = ssub.s32 1, %s5
  %s8 = scalar_select 0, %s7, %s5
  %s10 = sshll.u32 %s0, 4
  %s11 = int_to_ptr.hbm [resolvable:$true] %s10
  %13 = dma.hbm_to_smem %s11, 16, [#allocation3], [#allocation2]
  %15 = dma.done [#allocation2], 16
  %16 = sfence
  $region1: #{tpu_custom_call.1} parent=0
    #allocation4 [shape = 'u8[8192]{0}', space=vmem, size = 0x2000, scoped, tag = 'input window, operand 1']
    #allocation5 [shape = 's32[2]{0}', space=sflag, size = 0x8, scoped, tag = 'scoped memory for tpu_custom_call.1']
    #allocation6 [shape = 's32[2]{0}', space=sflag, size = 0x8, scoped, tag = 'scoped memory for tpu_custom_call.1']
    #allocation7 [shape = 'u8[65536]{0}', space=vmem, size = 0x10000, scoped, tag = 'input window, operand 2']
    #allocation8 [shape = 's32[2]{0}', space=sflag, size = 0x8, scoped, tag = 'scoped memory for tpu_custom_call.1']
    #allocation9 [shape = 'u8[1024]{0}', space=vmem, size = 0x400, scoped, tag = 'input window, operand 3']
    #allocation10 [shape = 'u8[16384]{0}', space=vmem, size = 0x4000, scoped, tag = 'output window, operand 0']
    %17 = vsyncpa [#allocation5], 0
    %s18 = scalar_lea.sflag [#allocation5], 1
    %19 = vsyncpa %s18, 0
    %20 = vsyncpa [#allocation8], 0
    %s21 = scalar_lea.sflag [#allocation8], 1
    %22 = vsyncpa %s21, 0
    %23 = vsyncpa [#allocation6], 0
    %s24 = scalar_lea.sflag [#allocation6], 1
    %25 = vsyncpa %s24, 0
    loop: start=0, step=1, limit=4
    $region2: #{tpu_custom_call.1} parent=1 // loop_pre_header
      _
    $region3: #{tpu_custom_call.1} parent=1 // loop_header
      %s27 = sphi 0, %s31
      %p28 = scmp.ge.s32.totalorder %s27, 4
      %s34 = sphi 0, %s53
      %s35 = sphi 0, %s49
      %s36 = sphi 0, %s45
      %s37 = sphi 0, %s34
      %s38 = sphi 0, %s35
      %s39 = sphi 0, %s36
      %s40 = sphi 0, %s37
      %s41 = sphi 0, %s38
      %s42 = sphi 0, %s39
      %s60 = sphi 0, %s62
      %s63 = sphi 0, %s60
      %s64 = sphi 0, %s63
      %s80 = sphi 0, %s64
      %s90 = sphi 0, %s92
      %s93 = sphi 0, %s90
      %s94 = sphi 0, %s93
      %s110 = sphi 0, %s94
      %s120 = sphi 0, %s122
      %s123 = sphi 0, %s120
      %s124 = sphi 0, %s123
      %s140 = sphi 0, %s124
      %s152 = sphi 0, %s154
      %s155 = sphi 0, %s152
      %s156 = sphi 0, %s155
      %s172 = sphi 0, %s156
    $region4: #{tpu_custom_call.1} parent=1 // loop_header_branch
      %30 = sbr.rel (%p28) target = $region8
    $region5: #{tpu_custom_call.1} parent=1 // loop_body
      %s32 = ssub.s32 %s27, 1
      %s33 = ssub.s32 %s27, 2
      %s43 = sadd.s32 1, %s36
      %p44 = scmp.ge.s32.totalorder %s43, 1
      %s45 = scalar_select %p44, 0, %s43
      %s46 = sadd.s32 1, %s35
      %s47 = scalar_select %p44, %s46, %s35
      %p48 = scmp.ge.s32.totalorder %s47, 1
      %s49 = scalar_select %p48, 0, %s47
      %s50 = sadd.s32 1, %s34
      %s51 = scalar_select %p48, %s50, %s34
      %p52 = scmp.ge.s32.totalorder %s51, 2
      %s53 = scalar_select %p52, 0, %s51
      %s54 = sld [smem:[#allocation3 + %s34]]
      %s55 = sld [smem:[#allocation3 + %s53]]
      %s56 = ssub.s32 %s54, %s55
      %s57 = ssub.s32 %s36, %s45
      %s58 = sor.u32 %s56, %s57
      %p59 = scmp.eq.s32.totalorder %s58, 0
      %s61 = sadd.s32 %s60, 1
      %s62 = scalar_select %p59, %s60, %s61
      %p65 = pneg %p59
      %p66 = scmp.eq.s32.totalorder %s27, 1
      %p67 = por %p65, %p66
      %p68 = scmp.ne.s32.totalorder %s60, %s63
      %p69 = scmp.eq.s32.totalorder %s27, 0
      %p70 = por %p68, %p69
      %p71 = scmp.ne.s32.totalorder %s60, %s63
      %p72 = scmp.eq.s32.totalorder %s32, 1
      %p73 = por %p71, %p72
      %p74 = scmp.ne.s32.totalorder %s63, %s64
      %p75 = scmp.eq.s32.totalorder %s32, 0
      %p76 = por %p74, %p75
      %p77 = scmp.ne.s32.totalorder %s63, %s64
      %p78 = scmp.eq.s32.totalorder %s33, 1
      %p79 = por %p77, %p78
      %p81 = scmp.ne.s32.totalorder %s64, %s80
      %p82 = scmp.eq.s32.totalorder %s33, 0
      %p83 = por %p81, %p82
      %s84 = sld [smem:[#allocation3 + %s34]]
      %s85 = sld [smem:[#allocation3 + %s53]]
      %s86 = ssub.s32 %s84, %s85
      %s87 = ssub.s32 %s35, %s49
      %s88 = sor.u32 %s86, %s87
      %p89 = scmp.eq.s32.totalorder %s88, 0
      %s91 = sadd.s32 %s90, 1
      %s92 = scalar_select %p89, %s90, %s91
      %p95 = pneg %p89
      %p96 = scmp.eq.s32.totalorder %s27, 1
      %p97 = por %p95, %p96
      %p98 = scmp.ne.s32.totalorder %s90, %s93
      %p99 = scmp.eq.s32.totalorder %s27, 0
      %p100 = por %p98, %p99
      %p101 = scmp.ne.s32.totalorder %s90, %s93
      %p102 = scmp.eq.s32.totalorder %s32, 1
      %p103 = por %p101, %p102
      %p104 = scmp.ne.s32.totalorder %s93, %s94
      %p105 = scmp.eq.s32.totalorder %s32, 0
      %p106 = por %p104, %p105
      %p107 = scmp.ne.s32.totalorder %s93, %s94
      %p108 = scmp.eq.s32.totalorder %s33, 1
      %p109 = por %p107, %p108
      %p111 = scmp.ne.s32.totalorder %s94, %s110
      %p112 = scmp.eq.s32.totalorder %s33, 0
      %p113 = por %p111, %p112
      %s114 = sld [smem:[#allocation3 + %s34]]
      %s115 = sld [smem:[#allocation3 + %s53]]
      %s116 = ssub.s32 %s114, %s115
      %s117 = ssub.s32 %s35, %s49
      %s118 = sor.u32 %s116, %s117
      %p119 = scmp.eq.s32.totalorder %s118, 0
      %s121 = sadd.s32 %s120, 1
      %s122 = scalar_select %p119, %s120, %s121
      %p125 = pneg %p119
      %p126 = scmp.eq.s32.totalorder %s27, 1
      %p127 = por %p125, %p126
      %p128 = scmp.ne.s32.totalorder %s120, %s123
      %p129 = scmp.eq.s32.totalorder %s27, 0
      %p130 = por %p128, %p129
      %p131 = scmp.ne.s32.totalorder %s120, %s123
      %p132 = scmp.eq.s32.totalorder %s32, 1
      %p133 = por %p131, %p132
      %p134 = scmp.ne.s32.totalorder %s123, %s124
      %p135 = scmp.eq.s32.totalorder %s32, 0
      %p136 = por %p134, %p135
      %p137 = scmp.ne.s32.totalorder %s123, %s124
      %p138 = scmp.eq.s32.totalorder %s33, 1
      %p139 = por %p137, %p138
      %p141 = scmp.ne.s32.totalorder %s124, %s140
      %p142 = scmp.eq.s32.totalorder %s33, 0
      %p143 = por %p141, %p142
      %s144 = sld [smem:[#allocation3 + %s34]]
      %s145 = sld [smem:[#allocation3 + %s53]]
      %s146 = ssub.s32 %s144, %s145
      %s147 = ssub.s32 %s36, %s45
      %s148 = sor.u32 %s146, %s147
      %s149 = ssub.s32 %s35, %s49
      %s150 = sor.u32 %s148, %s149
      %p151 = scmp.eq.s32.totalorder %s150, 0
      %s153 = sadd.s32 %s152, 1
      %s154 = scalar_select %p151, %s152, %s153
      %p157 = pneg %p151
      %p158 = scmp.eq.s32.totalorder %s27, 1
      %p159 = por %p157, %p158
      %p160 = scmp.ne.s32.totalorder %s152, %s155
      %p161 = scmp.eq.s32.totalorder %s27, 0
      %p162 = por %p160, %p161
      %p163 = scmp.ne.s32.totalorder %s152, %s155
      %p164 = scmp.eq.s32.totalorder %s32, 1
      %p165 = por %p163, %p164
      %p166 = scmp.ne.s32.totalorder %s155, %s156
      %p167 = scmp.eq.s32.totalorder %s32, 0
      %p168 = por %p166, %p167
      %p169 = scmp.ne.s32.totalorder %s155, %s156
      %p170 = scmp.eq.s32.totalorder %s33, 1
      %p171 = por %p169, %p170
      %p173 = scmp.ne.s32.totalorder %s156, %s172
      %p174 = scmp.eq.s32.totalorder %s33, 0
      %p175 = por %p173, %p174
      %p176 = scmp.le.s32.totalorder 1, %s27
      %p177 = scmp.lt.s32.totalorder %s27, 3
      %p178 = pnand %p176, %p177
      %p179 = pneg %p178
      // Predicated region
      $region9: #{tpu_custom_call.1} parent=5 // pred_check
        _
      $region10: #{tpu_custom_call.1} parent=5 // pred_check_branch
        %181 = sbr.rel (%p178) target = $region12
      $region11: #{tpu_custom_call.1} parent=5 // pred_region
        %s182 = ssub.s32 %s27, 1
      $region12: #{tpu_custom_call.1} parent=5 // pred_fallthru
        _
      %p183 = scmp.lt.s32.totalorder %s27, 2
      // Predicated region
      $region13: #{tpu_custom_call.1} parent=5 // pred_check
        %p184 = pneg %p183
      $region14: #{tpu_custom_call.1} parent=5 // pred_check_branch
        %186 = sbr.rel (%p184) target = $region16
      $region15: #{tpu_custom_call.1} parent=5 // pred_region
        // Predicated region
        $region17: #{tpu_custom_call.1} parent=15 // pred_check
          %p187 = pneg %p70
        $region18: #{tpu_custom_call.1} parent=15 // pred_check_branch
          %189 = sbr.rel (%p187) target = $region20
        $region19: #{tpu_custom_call.1} parent=15 // pred_region
          %s190 = sand.u32 %s60, 1
          %s191 = scalar_lea.sflag [#allocation5], %s190
          %s192 = sand.u32 %s60, 1
          %s193 = smul.addr %s192, 8
          %s194 = scalar_lea.vmem [#allocation4], %s193
          %s195 = sld [smem:[#allocation3 + %s34]]
          %s196 = smul.u32 2, %s36
          %198 = vsyncadd %s191, 0
          %s199 = smul.addr %s195, 2
          %s200 = sadd.s32 %s196, %s199
          %s201 = smul.addr %s200, 4
          %s202 = scalar_lea.hbm %s1, %s201
          %s203 = sshll.u32 %s202, 4
          %s204 = int_to_ptr.hbm [resolvable:$true] %s203
          %s205 = sshll.u32 %s194, 4
          %s206 = int_to_ptr.vmem [resolvable:$true] %s205
          %211 = dma.hbm_to_vmem [thread:$0]  %s204, 128, %s206, %s191, 64, 64, 4
        $region20: #{tpu_custom_call.1} parent=15 // pred_fallthru
          _
        // Predicated region
        $region21: #{tpu_custom_call.1} parent=15 // pred_check
          %p212 = pneg %p100
        $region22: #{tpu_custom_call.1} parent=15 // pred_check_branch
          %214 = sbr.rel (%p212) target = $region24
        $region23: #{tpu_custom_call.1} parent=15 // pred_region
          %s215 = sand.u32 %s27, 1
          %s216 = scalar_lea.sflag [#allocation8], %s215
          %s217 = sand.u32 %s90, 1
          %s218 = smul.addr %s217, 64
          %s219 = scalar_lea.vmem [#allocation7], %s218
          %s220 = sld [smem:[#allocation3 + %s34]]
          %222 = vsyncadd %s216, 0
          %s223 = smul.addr %s220, 16
          %s224 = sadd.s32 %s35, %s223
          %s225 = smul.addr %s224, 4
          %s226 = scalar_lea.hbm %s2, %s225
          %s227 = sshll.u32 %s226, 4
          %s228 = int_to_ptr.hbm [resolvable:$true] %s227
          %s229 = sshll.u32 %s219, 4
          %s230 = int_to_ptr.vmem [resolvable:$true] %s229
          %235 = dma.hbm_to_vmem [thread:$0]  %s228, 1024, %s230, %s216, 64, 64, 4
        $region24: #{tpu_custom_call.1} parent=15 // pred_fallthru
          _
        // Predicated region
        $region25: #{tpu_custom_call.1} parent=15 // pred_check
          %p236 = pneg %p130
        $region26: #{tpu_custom_call.1} parent=15 // pred_check_branch
          %238 = sbr.rel (%p236) target = $region28
        $region27: #{tpu_custom_call.1} parent=15 // pred_region
          %s239 = sand.u32 %s27, 1
          %s240 = scalar_lea.sflag [#allocation8], %s239
          %s241 = sand.u32 %s120, 1
          %s242 = scalar_lea.vmem [#allocation9], %s241
          %s243 = sld [smem:[#allocation3 + %s34]]
          %245 = vsyncadd %s240, 0
          %s246 = sadd.s32 %s35, %s243
          %s247 = scalar_lea.hbm %s3, %s246
          %s249 = sshll.u32 %s247, 4
          %s250 = int_to_ptr.hbm [resolvable:$true] %s249
          %s251 = sshll.u32 %s242, 4
          %s252 = int_to_ptr.vmem [resolvable:$true] %s251
          %254 = dma.hbm_to_vmem [thread:$0]  %s250, 16, %s252, %s240
        $region28: #{tpu_custom_call.1} parent=15 // pred_fallthru
          _
      $region16: #{tpu_custom_call.1} parent=5 // pred_fallthru
        _
      %p255 = scmp.le.s32.totalorder 1, %s27
      %p256 = scmp.lt.s32.totalorder %s27, 3
      %p257 = pnand %p255, %p256
      %p258 = pneg %p257
      // Predicated region
      $region29: #{tpu_custom_call.1} parent=5 // pred_check
        _
      $region30: #{tpu_custom_call.1} parent=5 // pred_check_branch
        %260 = sbr.rel (%p257) target = $region32
      $region31: #{tpu_custom_call.1} parent=5 // pred_region
        %s261 = ssub.s32 %s27, 1
        %s262 = sand.u32 %s63, 1
        %s263 = scalar_lea.sflag [#allocation5], %s262
        %s264 = sand.u32 %s63, 1
        %s265 = smul.addr %s264, 8
        %s266 = scalar_lea.vmem [#allocation4], %s265
        // Predicated region
        $region33: #{tpu_custom_call.1} parent=31 // pred_check
          %p267 = pneg %p76
        $region34: #{tpu_custom_call.1} parent=31 // pred_check_branch
          %269 = sbr.rel (%p267) target = $region36
        $region35: #{tpu_custom_call.1} parent=31 // pred_region
          %271 = dma.done %s263, 128
        $region36: #{tpu_custom_call.1} parent=31 // pred_fallthru
          _
        %s272 = sand.u32 %s32, 1
        %s273 = scalar_lea.sflag [#allocation8], %s272
        %s274 = sand.u32 %s93, 1
        %s275 = smul.addr %s274, 64
        %s276 = scalar_lea.vmem [#allocation7], %s275
        // Predicated region
        $region37: #{tpu_custom_call.1} parent=31 // pred_check
          %p277 = pneg %p106
        $region38: #{tpu_custom_call.1} parent=31 // pred_check_branch
          %279 = sbr.rel (%p277) target = $region40
        $region39: #{tpu_custom_call.1} parent=31 // pred_region
          %281 = dma.done %s273, 1024
        $region40: #{tpu_custom_call.1} parent=31 // pred_fallthru
          _
        %s282 = sand.u32 %s32, 1
        %s283 = scalar_lea.sflag [#allocation8], %s282
        %s284 = sand.u32 %s123, 1
        %s285 = scalar_lea.vmem [#allocation9], %s284
        // Predicated region
        $region41: #{tpu_custom_call.1} parent=31 // pred_check
          %p286 = pneg %p136
        $region42: #{tpu_custom_call.1} parent=31 // pred_check_branch
          %288 = sbr.rel (%p286) target = $region44
        $region43: #{tpu_custom_call.1} parent=31 // pred_region
          %290 = dma.done %s283, 16
        $region44: #{tpu_custom_call.1} parent=31 // pred_fallthru
          _
        %s291 = sand.u32 %s63, 1
        %s292 = scalar_lea.sflag [#allocation5], %s291
        %s293 = sand.u32 %s63, 1
        %s294 = smul.addr %s293, 8
        %s295 = scalar_lea.vmem [#allocation4], %s294
        %p296 = pneg %p76
        %p297 = pneg %p73
        %s298 = sand.u32 %s32, 1
        %s299 = scalar_lea.sflag [#allocation8], %s298
        %s300 = sand.u32 %s93, 1
        %s301 = smul.addr %s300, 64
        %s302 = scalar_lea.vmem [#allocation7], %s301
        %p303 = pneg %p106
        %p304 = pneg %p103
        %s305 = sand.u32 %s32, 1
        %s306 = scalar_lea.sflag [#allocation8], %s305
        %s307 = sand.u32 %s123, 1
        %s308 = scalar_lea.vmem [#allocation9], %s307
        %p309 = pneg %p136
        %p310 = pneg %p133
        %p311 = pneg %p168
        %p312 = pneg %p165
        %s313 = sand.u32 %s155, 1
        %s314 = scalar_lea.sflag [#allocation6], %s313
        %s315 = sand.u32 %s155, 1
        %s316 = smul.addr %s315, 16
        %s317 = scalar_lea.vmem [#allocation10], %s316
        %s318 = sld [smem:[#allocation3 + %s37]]
        %s319 = smul.u32 2, %s39
        %s320 = sld [smem:[#allocation3 + %s37]]
        %s321 = sld [smem:[#allocation3 + %s37]]
        %s322 = sld [smem:[#allocation3 + %s37]]
        %s323 = smul.u32 2, %s39
        %v324 = vld [vmem:[%s266] sm:$0xf]
        %v325 = vld [vmem:[%s266 + $0x4] sm:$0xf]
        %v326 = vld [vmem:[%s276] sm:$0xf]
        %v327 = vld [vmem:[%s276 + $0x4] sm:$0xf]
        %v328 = vld [vmem:[%s276 + $0x8] sm:$0xf]
        %v329 = vld [vmem:[%s276 + $0xc] sm:$0xf]
        %v330 = vld [vmem:[%s276 + $0x10] sm:$0xf]
        %v331 = vld [vmem:[%s276 + $0x14] sm:$0xf]
        %v332 = vld [vmem:[%s276 + $0x18] sm:$0xf]
        %v333 = vld [vmem:[%s276 + $0x1c] sm:$0xf]
        %v334 = vld [vmem:[%s276 + $0x20] sm:$0xf]
        %v335 = vld [vmem:[%s276 + $0x24] sm:$0xf]
        %v336 = vld [vmem:[%s276 + $0x28] sm:$0xf]
        %v337 = vld [vmem:[%s276 + $0x2c] sm:$0xf]
        %v338 = vld [vmem:[%s276 + $0x30] sm:$0xf]
        %v339 = vld [vmem:[%s276 + $0x34] sm:$0xf]
        %v340 = vld [vmem:[%s276 + $0x38] sm:$0xf]
        %v341 = vld [vmem:[%s276 + $0x3c] sm:$0xf]
        %v342 = vld [vmem:[%s285] sm:$0x1]
        %v344 = vperm.slane %v342, 0
        %v348 = vunpack.c.l.b16 %v324
        %v349 = vunpack.c.l.b16 %v325
        %v350 = vpack.c.b16 %v349, %v348
        %v368 = vunpack.c.l.b16 %v326
        %v369 = vunpack.c.l.b16 %v327
        %v370 = vunpack.c.l.b16 %v328
        %v371 = vunpack.c.l.b16 %v329
        %v372 = vunpack.c.l.b16 %v330
        %v373 = vunpack.c.l.b16 %v331
        %v374 = vunpack.c.l.b16 %v332
        %v375 = vunpack.c.l.b16 %v333
        %v376 = vunpack.c.l.b16 %v334
        %v377 = vunpack.c.l.b16 %v335
        %v378 = vunpack.c.l.b16 %v336
        %v379 = vunpack.c.l.b16 %v337
        %v380 = vunpack.c.l.b16 %v338
        %v381 = vunpack.c.l.b16 %v339
        %v382 = vunpack.c.l.b16 %v340
        %v383 = vunpack.c.l.b16 %v341
        %v384 = vpack.c.b16 %v369, %v368
        %v385 = vpack.c.b16 %v371, %v370
        %v386 = vpack.c.b16 %v373, %v372
        %v387 = vpack.c.b16 %v375, %v374
        %v388 = vpack.c.b16 %v377, %v376
        %v389 = vpack.c.b16 %v379, %v378
        %v390 = vpack.c.b16 %v381, %v380
        %v391 = vpack.c.b16 %v383, %v382
        %400 = vmatpush.bf16.msra.mxu0 %v391
        %401 = vmatpush.bf16.msra.mxu0 %v390
        %402 = vmatpush.bf16.msra.mxu0 %v389
        %403 = vmatpush.bf16.msra.mxu0 %v388
        %404 = vmatpush.bf16.msra.mxu0 %v387
        %405 = vmatpush.bf16.msra.mxu0 %v386
        %406 = vmatpush.bf16.msra.mxu0 %v385
        %407 = vmatpush.bf16.msra.mxu0 %v384
        %408 = vmatmul.bf16.gmra.mxu0 %v350
        %v409 = vpop.f32.mrf.mxu0
        %v410 = vadd.f32 %v344, %v409
        %v411 = vpop.f32.mrf.mxu0
        %v412 = vadd.f32 %v344, %v411
        %413 = vdwg.mxu0
        %414 = vst [vmem:[%s317] sm:$0xff] %v410
        %415 = vst [vmem:[%s317 + $0x8] sm:$0xff] %v412
        %s416 = sand.u32 %s155, 1
        %s417 = scalar_lea.sflag [#allocation6], %s416
        %s418 = sand.u32 %s155, 1
        %s419 = smul.addr %s418, 16
        %s420 = scalar_lea.vmem [#allocation10], %s419
        // Predicated region
        $region45: #{tpu_custom_call.1} parent=31 // pred_check
          %p421 = pneg %p165
        $region46: #{tpu_custom_call.1} parent=31 // pred_check_branch
          %423 = sbr.rel (%p421) target = $region48
        $region47: #{tpu_custom_call.1} parent=31 // pred_region
          %s424 = sld [smem:[#allocation3 + %s37]]
          %s425 = smul.u32 2, %s39
          %427 = vsyncadd %s417, 0
          %s428 = sadd.s32 %s38, %s425
          %s429 = smul.addr %s424, 2
          %s430 = sadd.s32 %s428, %s429
          %s431 = smul.addr %s430, 8
          %s432 = scalar_lea.hbm %s4, %s431
          %s433 = sshll.u32 %s420, 4
          %s434 = int_to_ptr.vmem [resolvable:$true] %s433
          %s435 = sshll.u32 %s432, 4
          %s436 = int_to_ptr.hbm [resolvable:$true] %s435
          %441 = dma.vmem_to_hbm [thread:$0]  %s434, 256, %s436, %s417, 128, 128, 8
        $region48: #{tpu_custom_call.1} parent=31 // pred_fallthru
          _
      $region32: #{tpu_custom_call.1} parent=5 // pred_fallthru
        _
      %p442 = scmp.le.s32.totalorder 2, %s27
      // Predicated region
      $region49: #{tpu_custom_call.1} parent=5 // pred_check
        %p443 = pneg %p442
      $region50: #{tpu_custom_call.1} parent=5 // pred_check_branch
        %445 = sbr.rel (%p443) target = $region52
      $region51: #{tpu_custom_call.1} parent=5 // pred_region
        %s446 = ssub.s32 %s27, 2
        // Predicated region
        $region53: #{tpu_custom_call.1} parent=51 // pred_check
          %p447 = pneg %p171
        $region54: #{tpu_custom_call.1} parent=51 // pred_check_branch
          %449 = sbr.rel (%p447) target = $region56
        $region55: #{tpu_custom_call.1} parent=51 // pred_region
          %s450 = sand.u32 %s156, 1
          %s451 = scalar_lea.sflag [#allocation6], %s450
          %s452 = sand.u32 %s156, 1
          %s453 = smul.addr %s452, 16
          %s454 = scalar_lea.vmem [#allocation10], %s453
          %456 = dma.done %s451, 256
        $region56: #{tpu_custom_call.1} parent=51 // pred_fallthru
          _
      $region52: #{tpu_custom_call.1} parent=5 // pred_fallthru
        _
    $region6: #{tpu_custom_call.1} parent=1 // loop_footer
      %s31 = sadd.s32 1, %s27
    $region7: #{tpu_custom_call.1} parent=1 // loop_footer_branch
      %26 = sbr.rel target = $region3
    $region8: #{tpu_custom_call.1} parent=1 // loop_exit
      _
    %457 = vsyncpa [#allocation5], 1
    %s458 = scalar_lea.sflag [#allocation5], 1
    %459 = vsyncpa %s458, 1
    %460 = vsyncpa [#allocation8], 1
    %s461 = scalar_lea.sflag [#allocation8], 1
    %462 = vsyncpa %s461, 1
    %463 = vsyncpa [#allocation6], 1
    %s464 = scalar_lea.sflag [#allocation6], 1
    %465 = vsyncpa %s464, 1

</llo_original>
